<compile_context>
chip_gen: v7x
topology: tpu7x:2x2x1
jax: 0.10.0
libtpu: 0.0.40
codegen_flags: <defaults>
</compile_context>

<pallas_src>
import jax
import jax.numpy as jnp
from jax import lax
from jax.experimental import pallas as pl
from jax.experimental.pallas import tpu as pltpu

PAD_ID = 1          # config.pad_token_id (RoBERTa-style)
NCLS = 2            # nn.Linear(hidden_size, 2)
NPAD = 128          # classifier output padded to one full lane width


def _make_kernel(TB, S, H, V):
    TBS = TB * S

    def kernel(ids_ref,                 # [TBS, 1] int32 token ids (this tile)
               pool_ref,                # [1, TB, TBS] bf16 block-diag pooling weights
               emb_ref,                 # [V, H] bf16 embedding table (VMEM resident)
               w_enc_ref, b_enc_ref,    # [H, H] bf16, [1, H] f32
               w_cls_ref, b_cls_ref,    # [H, NPAD] bf16, [1, NPAD] f32 (zero padded)
               loss_ref,                # out block [1, 1, NPAD] f32 (lane-dense row)
               logits_ref):             # out block [TB, NPAD] f32 (padded logits)
        # ---- embedding gather as an exact one-hot MXU matmul.
        # one-hot rows select exactly one bf16 table row each, so the f32
        # accumulation is exact (no DMA gather, no exposed latency: the table
        # block is pipelined by BlockSpec like any other input).
        ids = ids_ref[...]                                        # [TBS, 1] int32
        vocab = lax.broadcasted_iota(jnp.int32, (TBS, V), 1)
        onehot = (vocab == ids).astype(jnp.bfloat16)              # [TBS, V]
        x = jnp.dot(onehot, emb_ref[...],
                    preferred_element_type=jnp.float32)           # [TBS, H] == bf16 rows

        # ---- synthetic encoder: one flat (TBS,H)@(H,H) bf16 MXU matmul + GELU
        h = jnp.dot(x.astype(jnp.bfloat16), w_enc_ref[...],
                    preferred_element_type=jnp.float32) + b_enc_ref[...]
        # TODO(synk): torch nn.GELU defaults to exact erf; tanh approximation
        # is used here (the encoder is a synthetic stand-in anyway).
        h = jax.nn.gelu(h)                                        # [TBS, H] f32

        # ---- masked mean pooling as one block-diagonal bf16 MXU matmul
        vec = jnp.dot(pool_ref[0], h.astype(jnp.bfloat16),
                      preferred_element_type=jnp.float32)         # [TB, H] f32

        # ---- classifier (zero-padded to 128 lanes; real logits in cols [0, NCLS))
        logits_p = jnp.dot(vec.astype(jnp.bfloat16), w_cls_ref[...],
                           preferred_element_type=jnp.float32) + b_cls_ref[...]
        logits_ref[...] = logits_p                                # [TB, NPAD]

        col = lax.broadcasted_iota(jnp.int32, (TB, NPAD), 1)
        valid = col < NCLS
        logits = jnp.where(valid, logits_p, jnp.float32(-1e30))

        # ---- log-softmax / softmax (exact division; padded lanes contribute 0)
        m = jnp.max(logits, axis=-1, keepdims=True)
        z = logits - m
        ez = jnp.where(valid, jnp.exp(z), 0.0)
        denom = jnp.sum(ez, axis=-1, keepdims=True)
        logp = z - jnp.log(denom)
        p = ez / denom

        # Second R-Drop pass: the deterministic (eval-mode) encoder makes it
        # bit-identical, so reuse the first pass instead of recomputing it.
        logq, q = logp, p

        p_loss = jnp.sum(q * (logq - logp))   # F.kl_div(logp, q, 'none').sum()
        q_loss = jnp.sum(p * (logp - logq))   # F.kl_div(logq, p, 'none').sum()
        partial = 0.5 * (p_loss + q_loss)

        # single lane-dense row writeback (512 B) instead of an 8x128 block
        loss_ref[...] = jnp.zeros(loss_ref.shape, jnp.float32) + partial

    return kernel


def rdrop_forward(input_ids, emb_table, w_enc, b_enc, w_cls, b_cls, *,
                  batch_tile=None):
    """Returns (scalar R-Drop KL loss, [B, NCLS] logits of the first pass)."""
    B, S = input_ids.shape
    V, H = emb_table.shape

    if batch_tile is None:
        # Default keeps G = 2 so the "parallel" batch grid feeds both v7x
        # TensorCores.  On single-TC parts (v5e/v6e) pass batch_tile=B to get
        # one fatter tile (fewer grid steps, better MXU occupancy).
        batch_tile = B // 2 if (B % 2 == 0 and (B // 2) % 8 == 0) else B
    TB = min(batch_tile, B)
    assert B % TB == 0, "batch must be divisible by the batch tile"
    assert TB % 8 == 0 or TB == B, "batch tile must respect TPU (8,128) tiling"
    G = B // TB
    TBS = TB * S

    # ---- pooling weights (shared by both R-Drop passes).  Only the diagonal
    # blocks are materialized: [G, TB, TB*S], i.e. O(B*TB*S), not O(B^2*S).
    mask = (input_ids != PAD_ID).astype(jnp.float32)                   # [B, S]
    counts = jnp.maximum(jnp.sum(mask, axis=-1, keepdims=True), 1.0)   # all-pad guard
    poolw = (mask / counts).reshape(G, TB, S)                          # [G, TB, S]
    eye_tb = jnp.eye(TB, dtype=jnp.float32)
    pool_diag = (eye_tb[None, :, :, None] * poolw[:, None, :, :]
                 ).reshape(G, TB, TBS).astype(jnp.bfloat16)            # [G, TB, TBS]

    # token ids as a lane-1 column so each tile is one clean (TBS, 1) block
    ids_col = input_ids.reshape(B * S, 1).astype(jnp.int32)

    # bf16 weights (MXU-friendly); classifier zero-padded to 128 output lanes
    emb_bf = emb_table.astype(jnp.bfloat16)
    w_enc_bf = w_enc.astype(jnp.bfloat16)
    w_cls_p = jnp.zeros((H, NPAD), jnp.bfloat16).at[:, :NCLS].set(
        w_cls.astype(jnp.bfloat16))
    b_cls_p = jnp.zeros((1, NPAD), jnp.float32).at[:, :NCLS].set(
        b_cls.reshape(1, NCLS).astype(jnp.float32))
    b_enc_f = b_enc.reshape(1, H).astype(jnp.float32)

    # VMEM budget (per buffer): V*H + H*H + H*NPAD bf16 + TBS*H-sized live f32
    # intermediates -- comfortably under v7x's 32 MiB default scoped VMEM at
    # these sizes; revisit vmem_limit_bytes when scaling H/S/V.
    grid_spec = pltpu.PrefetchScalarGridSpec(
        num_scalar_prefetch=0,
        grid=(G,),
        in_specs=[
            pl.BlockSpec((TBS, 1), lambda i: (i, 0)),        # token ids (this tile)
            pl.BlockSpec((1, TB, TBS), lambda i: (i, 0, 0)), # block-diag pooling tile
            pl.BlockSpec((V, H), lambda i: (0, 0)),          # emb table (bf16, VMEM)
            pl.BlockSpec((H, H), lambda i: (0, 0)),          # w_enc (bf16)
            pl.BlockSpec((1, H), lambda i: (0, 0)),          # b_enc (f32)
            pl.BlockSpec((H, NPAD), lambda i: (0, 0)),       # w_cls (bf16, padded)
            pl.BlockSpec((1, NPAD), lambda i: (0, 0)),       # b_cls (f32, padded)
        ],
        out_specs=(
            pl.BlockSpec((1, 1, NPAD), lambda i: (i, 0, 0)), # per-tile partial loss
            pl.BlockSpec((TB, NPAD), lambda i: (i, 0)),      # padded logits
        ),
    )

    loss_parts, logits_pad = pl.pallas_call(
        _make_kernel(TB, S, H, V),
        out_shape=(jax.ShapeDtypeStruct((G, 1, NPAD), jnp.float32),
                   jax.ShapeDtypeStruct((B, NPAD), jnp.float32)),
        grid_spec=grid_spec,
        compiler_params=pltpu.CompilerParams(
            # batch tiles are independent -> both v7x TensorCores get work
            dimension_semantics=("parallel",),
        ),
    )(ids_col, pool_diag, emb_bf, w_enc_bf, b_enc_f, w_cls_p, b_cls_p)

    loss = jnp.sum(loss_parts[:, 0, 0])
    return loss, logits_pad[:, :NCLS]


if __name__ == "__main__":
    B, S, H, V = 16, 16, 128, 64

    key = jax.random.PRNGKey(0)
    k_emb, k_we, k_be, k_wc, k_bc, k_ids = jax.random.split(key, 6)

    # deterministic parameter init
    emb_table = 0.02 * jax.random.normal(k_emb, (V, H), dtype=jnp.float32)
    w_enc = 0.02 * jax.random.normal(k_we, (H, H), dtype=jnp.float32)
    b_enc = 0.02 * jax.random.normal(k_be, (1, H), dtype=jnp.float32)
    w_cls = 0.02 * jax.random.normal(k_wc, (H, NCLS), dtype=jnp.float32)
    b_cls = 0.02 * jax.random.normal(k_bc, (1, NCLS), dtype=jnp.float32)

    # input ids with some trailing padding (pad id = 1)
    input_ids = jax.random.randint(k_ids, (B, S), 2, V, dtype=jnp.int32)
    input_ids = input_ids.at[0, 10:].set(PAD_ID)
    input_ids = input_ids.at[3, 4:].set(PAD_ID)
    input_ids = input_ids.at[9, 12:].set(PAD_ID)

    loss, logits = jax.jit(rdrop_forward)(input_ids, emb_table, w_enc, b_enc,
                                          w_cls, b_cls)
    jax.block_until_ready((loss, logits))

    # ---- pure-JAX reference with matching (bf16-in / f32-accumulate) numerics
    mask = (input_ids != PAD_ID).astype(jnp.float32)
    counts = jnp.maximum(mask.sum(-1, keepdims=True), 1.0)
    poolw_bf = (mask / counts).astype(jnp.bfloat16)                     # [B, S]
    x_ref = emb_table.astype(jnp.bfloat16)[input_ids]                   # [B, S, H]
    h_ref = jnp.dot(x_ref, w_enc.astype(jnp.bfloat16),
                    preferred_element_type=jnp.float32) + b_enc
    h_ref = jax.nn.gelu(h_ref)
    vec_ref = jnp.einsum("bs,bsh->bh", poolw_bf, h_ref.astype(jnp.bfloat16),
                         preferred_element_type=jnp.float32)
    logits_ref = jnp.dot(vec_ref.astype(jnp.bfloat16), w_cls.astype(jnp.bfloat16),
                         preferred_element_type=jnp.float32) + b_cls

    assert loss.shape == ()
    assert logits.shape == (B, NCLS)
    assert bool(jnp.isfinite(loss))
    # eval-mode R-Drop: both passes identical -> KL loss is exactly 0
    assert abs(float(loss)) < 1e-6
    # verify the encoder/pooling/classifier compute path against the reference
    assert bool(jnp.allclose(logits, logits_ref, rtol=1e-2, atol=2e-3))
    print("KERNEL_OK")
</pallas_src>

<mosaic_0001>
module attributes {stable_mosaic.version = 11 : i64} {
  func.func @kernel(%arg0: i32, %arg1: memref<128x1xi32, #tpu.memory_space<vmem>>, %arg2: memref<1x8x128xbf16, #tpu.memory_space<vmem>>, %arg3: memref<64x128xbf16, #tpu.memory_space<vmem>>, %arg4: memref<128x128xbf16, #tpu.memory_space<vmem>>, %arg5: memref<1x128xf32, #tpu.memory_space<vmem>>, %arg6: memref<128x128xbf16, #tpu.memory_space<vmem>>, %arg7: memref<1x128xf32, #tpu.memory_space<vmem>>, %arg8: memref<1x1x128xf32, #tpu.memory_space<vmem>>, %arg9: memref<8x128xf32, #tpu.memory_space<vmem>>) attributes {dimension_semantics = [#tpu.dimension_semantics<parallel>], iteration_bounds = array<i64: 2>, scalar_prefetch = 0 : i64, scratch_operands = 0 : i64, tpu.core_type = #tpu.core_type<tc>, window_params = [{transform_indices = @transform_0, window_bounds = array<i64: 128, 1>}, {transform_indices = @transform_1, window_bounds = array<i64: 1, 8, 128>}, {pipeline_mode = #tpu.pipeline_mode<synchronous>, transform_indices = @transform_2, window_bounds = array<i64: 64, 128>}, {pipeline_mode = #tpu.pipeline_mode<synchronous>, transform_indices = @transform_3, window_bounds = array<i64: 128, 128>}, {pipeline_mode = #tpu.pipeline_mode<synchronous>, transform_indices = @transform_4, window_bounds = array<i64: 1, 128>}, {pipeline_mode = #tpu.pipeline_mode<synchronous>, transform_indices = @transform_5, window_bounds = array<i64: 128, 128>}, {pipeline_mode = #tpu.pipeline_mode<synchronous>, transform_indices = @transform_6, window_bounds = array<i64: 1, 128>}, {transform_indices = @transform_7, window_bounds = array<i64: 1, 1, 128>}, {transform_indices = @transform_8, window_bounds = array<i64: 8, 128>}]} {
    %c0 = arith.constant 0 : index
    %c0_0 = arith.constant 0 : index
    %0 = vector.load %arg1[%c0, %c0_0] : memref<128x1xi32, #tpu.memory_space<vmem>>, vector<128x1xi32>
    %1 = tpu.iota {dimensions = array<i32: 1>} : vector<128x64xi32>
    %2 = vector.broadcast %0 : vector<128x1xi32> to vector<128x64xi32>
    %3 = arith.cmpi eq, %1, %2 : vector<128x64xi32>
    %4 = arith.extui %3 : vector<128x64xi1> to vector<128x64xi32>
    %5 = arith.sitofp %4 : vector<128x64xi32> to vector<128x64xf32>
    %6 = arith.truncf %5 : vector<128x64xf32> to vector<128x64xbf16>
    %c0_1 = arith.constant 0 : index
    %c0_2 = arith.constant 0 : index
    %7 = vector.load %arg3[%c0_1, %c0_2] : memref<64x128xbf16, #tpu.memory_space<vmem>>, vector<64x128xbf16>
    %cst = arith.constant dense<0.000000e+00> : vector<128x128xf32>
    %8 = tpu.matmul %6, %7, %cst {dimension_numbers = #tpu.dot_dimension_numbers<[1], [0], [0], [1], [0, 0, 1, 1], [], []>} : vector<128x64xbf16>, vector<64x128xbf16>, vector<128x128xf32> -> vector<128x128xf32>
    %9 = arith.truncf %8 : vector<128x128xf32> to vector<128x128xbf16>
    %c0_3 = arith.constant 0 : index
    %c0_4 = arith.constant 0 : index
    %10 = vector.load %arg4[%c0_3, %c0_4] : memref<128x128xbf16, #tpu.memory_space<vmem>>, vector<128x128xbf16>
    %cst_5 = arith.constant dense<0.000000e+00> : vector<128x128xf32>
    %11 = tpu.matmul %9, %10, %cst_5 {dimension_numbers = #tpu.dot_dimension_numbers<[1], [0], [0], [1], [0, 0, 1, 1], [], []>} : vector<128x128xbf16>, vector<128x128xbf16>, vector<128x128xf32> -> vector<128x128xf32>
    %c0_6 = arith.constant 0 : index
    %c0_7 = arith.constant 0 : index
    %12 = vector.load %arg5[%c0_6, %c0_7] : memref<1x128xf32, #tpu.memory_space<vmem>>, vector<1x128xf32>
    %13 = vector.broadcast %12 : vector<1x128xf32> to vector<128x128xf32>
    %14 = arith.addf %11, %13 : vector<128x128xf32>
    %15 = arith.mulf %14, %14 : vector<128x128xf32>
    %16 = arith.mulf %14, %15 : vector<128x128xf32>
    %cst_8 = arith.constant 4.471500e-02 : f32
    %17 = vector.broadcast %cst_8 : f32 to vector<128x128xf32>
    %18 = arith.mulf %17, %16 : vector<128x128xf32>
    %19 = arith.addf %14, %18 : vector<128x128xf32>
    %cst_9 = arith.constant 0.797884583 : f32
    %20 = vector.broadcast %cst_9 : f32 to vector<128x128xf32>
    %21 = arith.mulf %20, %19 : vector<128x128xf32>
    %22 = math.tanh %21 : vector<128x128xf32>
    %cst_10 = arith.constant 1.000000e+00 : f32
    %23 = vector.broadcast %cst_10 : f32 to vector<128x128xf32>
    %24 = arith.addf %23, %22 : vector<128x128xf32>
    %cst_11 = arith.constant 5.000000e-01 : f32
    %25 = vector.broadcast %cst_11 : f32 to vector<128x128xf32>
    %26 = arith.mulf %25, %24 : vector<128x128xf32>
    %27 = arith.mulf %14, %26 : vector<128x128xf32>
    %c0_12 = arith.constant 0 : index
    %c0_13 = arith.constant 0 : index
    %c0_14 = arith.constant 0 : index
    %28 = vector.load %arg2[%c0_12, %c0_13, %c0_14] : memref<1x8x128xbf16, #tpu.memory_space<vmem>>, vector<1x8x128xbf16>
    %29 = vector.shape_cast %28 : vector<1x8x128xbf16> to vector<8x128xbf16>
    %30 = arith.truncf %27 : vector<128x128xf32> to vector<128x128xbf16>
    %cst_15 = arith.constant dense<0.000000e+00> : vector<8x128xf32>
    %31 = tpu.matmul %29, %30, %cst_15 {dimension_numbers = #tpu.dot_dimension_numbers<[1], [0], [0], [1], [0, 0, 1, 1], [], []>} : vector<8x128xbf16>, vector<128x128xbf16>, vector<8x128xf32> -> vector<8x128xf32>
    %32 = arith.truncf %31 : vector<8x128xf32> to vector<8x128xbf16>
    %c0_16 = arith.constant 0 : index
    %c0_17 = arith.constant 0 : index
    %33 = vector.load %arg6[%c0_16, %c0_17] : memref<128x128xbf16, #tpu.memory_space<vmem>>, vector<128x128xbf16>
    %cst_18 = arith.constant dense<0.000000e+00> : vector<8x128xf32>
    %34 = tpu.matmul %32, %33, %cst_18 {dimension_numbers = #tpu.dot_dimension_numbers<[1], [0], [0], [1], [0, 0, 1, 1], [], []>} : vector<8x128xbf16>, vector<128x128xbf16>, vector<8x128xf32> -> vector<8x128xf32>
    %c0_19 = arith.constant 0 : index
    %c0_20 = arith.constant 0 : index
    %35 = vector.load %arg7[%c0_19, %c0_20] : memref<1x128xf32, #tpu.memory_space<vmem>>, vector<1x128xf32>
    %36 = vector.broadcast %35 : vector<1x128xf32> to vector<8x128xf32>
    %37 = arith.addf %34, %36 : vector<8x128xf32>
    %c0_21 = arith.constant 0 : index
    %c0_22 = arith.constant 0 : index
    %38 = vector.load %arg9[%c0_21, %c0_22] : memref<8x128xf32, #tpu.memory_space<vmem>>, vector<8x128xf32>
    tpu.vector_store %arg9[%c0_21, %c0_22], %37 {strides = array<i32>} : memref<8x128xf32, #tpu.memory_space<vmem>>, vector<8x128xf32>,
    %39 = tpu.iota {dimensions = array<i32: 1>} : vector<8x128xi32>
    %c2_i32 = arith.constant 2 : i32
    %40 = vector.broadcast %c2_i32 : i32 to vector<8x128xi32>
    %41 = arith.cmpi slt, %39, %40 : vector<8x128xi32>
    %cst_23 = arith.constant -1.000000e+30 : f32
    %42 = vector.broadcast %cst_23 : f32 to vector<8x128xf32>
    %43 = arith.select %41, %37, %42 : vector<8x128xi1>, vector<8x128xf32>
    %cst_24 = arith.constant dense<0xFF800000> : vector<8xf32>
    %44 = vector.multi_reduction <maximumf>, %43, %cst_24 [1] : vector<8x128xf32> to vector<8xf32>
    %45 = vector.shape_cast %44 : vector<8xf32> to vector<8x1xf32>
    %46 = vector.broadcast %45 : vector<8x1xf32> to vector<8x128xf32>
    %47 = arith.subf %43, %46 : vector<8x128xf32>
    %48 = math.exp %47 : vector<8x128xf32>
    %cst_25 = arith.constant 0.000000e+00 : f32
    %49 = vector.broadcast %cst_25 : f32 to vector<8x128xf32>
    %50 = arith.select %41, %48, %49 : vector<8x128xi1>, vector<8x128xf32>
    %cst_26 = arith.constant dense<0.000000e+00> : vector<8xf32>
    %51 = vector.multi_reduction <add>, %50, %cst_26 [1] : vector<8x128xf32> to vector<8xf32>
    %52 = vector.shape_cast %51 : vector<8xf32> to vector<8x1xf32>
    %53 = math.log %52 : vector<8x1xf32>
    %54 = vector.broadcast %53 : vector<8x1xf32> to vector<8x128xf32>
    %55 = arith.subf %47, %54 : vector<8x128xf32>
    %56 = vector.broadcast %52 : vector<8x1xf32> to vector<8x128xf32>
    %57 = arith.divf %50, %56 : vector<8x128xf32>
    %58 = arith.subf %55, %55 : vector<8x128xf32>
    %59 = arith.mulf %57, %58 : vector<8x128xf32>
    %60 = vector.shape_cast %59 : vector<8x128xf32> to vector<1x8x128xf32>
    %cst_27 = arith.constant dense<0.000000e+00> : vector<1xf32>
    %61 = vector.multi_reduction <add>, %60, %cst_27 [1, 2] : vector<1x8x128xf32> to vector<1xf32>
    %62 = vector.shape_cast %61 : vector<1xf32> to vector<1x1x1xf32>
    %63 = vector.extract %62[0, 0, 0] : f32 from vector<1x1x1xf32>
    %64 = arith.subf %55, %55 : vector<8x128xf32>
    %65 = arith.mulf %57, %64 : vector<8x128xf32>
    %66 = vector.shape_cast %65 : vector<8x128xf32> to vector<1x8x128xf32>
    %cst_28 = arith.constant dense<0.000000e+00> : vector<1xf32>
    %67 = vector.multi_reduction <add>, %66, %cst_28 [1, 2] : vector<1x8x128xf32> to vector<1xf32>
    %68 = vector.shape_cast %67 : vector<1xf32> to vector<1x1x1xf32>
    %69 = vector.extract %68[0, 0, 0] : f32 from vector<1x1x1xf32>
    %70 = arith.addf %63, %69 : f32
    %cst_29 = arith.constant 5.000000e-01 : f32
    %71 = arith.mulf %cst_29, %70 : f32
    %cst_30 = arith.constant 0.000000e+00 : f32
    %72 = vector.broadcast %cst_30 : f32 to vector<1x1x128xf32>
    %73 = vector.broadcast %71 : f32 to vector<1x1x128xf32>
    %74 = arith.addf %72, %73 : vector<1x1x128xf32>
    %c0_31 = arith.constant 0 : index
    %c0_32 = arith.constant 0 : index
    %c0_33 = arith.constant 0 : index
    %75 = vector.load %arg8[%c0_31, %c0_32, %c0_33] : memref<1x1x128xf32, #tpu.memory_space<vmem>>, vector<1x1x128xf32>
    tpu.vector_store %arg8[%c0_31, %c0_32, %c0_33], %74 {strides = array<i32>} : memref<1x1x128xf32, #tpu.memory_space<vmem>>, vector<1x1x128xf32>,
    return
  }
  func.func @transform_0(%arg0: i32) -> (i32, i32) {
    %c0_i32 = arith.constant 0 : i32
    %c0_i32_0 = arith.constant 0 : i32
    return %arg0, %c0_i32 : i32, i32
  }
  func.func @transform_1(%arg0: i32) -> (i32, i32, i32) {
    %c0_i32 = arith.constant 0 : i32
    %c0_i32_0 = arith.constant 0 : i32
    %c0_i32_1 = arith.constant 0 : i32
    return %arg0, %c0_i32, %c0_i32_0 : i32, i32, i32
  }
  func.func @transform_2(%arg0: i32) -> (i32, i32) {
    %c0_i32 = arith.constant 0 : i32
    %c0_i32_0 = arith.constant 0 : i32
    %c0_i32_1 = arith.constant 0 : i32
    return %c0_i32, %c0_i32_0 : i32, i32
  }
  func.func @transform_3(%arg0: i32) -> (i32, i32) {
    %c0_i32 = arith.constant 0 : i32
    %c0_i32_0 = arith.constant 0 : i32
    %c0_i32_1 = arith.constant 0 : i32
    return %c0_i32, %c0_i32_0 : i32, i32
  }
  func.func @transform_4(%arg0: i32) -> (i32, i32) {
    %c0_i32 = arith.constant 0 : i32
    %c0_i32_0 = arith.constant 0 : i32
    %c0_i32_1 = arith.constant 0 : i32
    return %c0_i32, %c0_i32_0 : i32, i32
  }
  func.func @transform_5(%arg0: i32) -> (i32, i32) {
    %c0_i32 = arith.constant 0 : i32
    %c0_i32_0 = arith.constant 0 : i32
    %c0_i32_1 = arith.constant 0 : i32
    return %c0_i32, %c0_i32_0 : i32, i32
  }
  func.func @transform_6(%arg0: i32) -> (i32, i32) {
    %c0_i32 = arith.constant 0 : i32
    %c0_i32_0 = arith.constant 0 : i32
    %c0_i32_1 = arith.constant 0 : i32
    return %c0_i32, %c0_i32_0 : i32, i32
  }
  func.func @transform_7(%arg0: i32) -> (i32, i32, i32) {
    %c0_i32 = arith.constant 0 : i32
    %c0_i32_0 = arith.constant 0 : i32
    %c0_i32_1 = arith.constant 0 : i32
    return %arg0, %c0_i32, %c0_i32_0 : i32, i32, i32
  }
  func.func @transform_8(%arg0: i32) -> (i32, i32) {
    %c0_i32 = arith.constant 0 : i32
    %c0_i32_0 = arith.constant 0 : i32
    return %arg0, %c0_i32 : i32, i32
  }
}

</mosaic_0001>

<llo_original>
// kernel: rdrop_forward.1
$region0: #{rdrop_forward.1}
  #allocation0 [shape = 'u32[]', space=smem, size = 0x4, offset = 0x4, fixed_abs, tag = 'smem constant byte address 0x4 - core index']
  #allocation1 [shape = 'u32[144,128]{1,0:T(1,128)}', space=vmem, size = 0x12000, scoped, tag = 'internal scratch']
  %s0 = inlined_call_operand.vmem [shape: s32[256,1], index: 0, kind: input, shape index: {}]
  %s1 = inlined_call_operand.vmem [shape: bf16[2,8,128], index: 1, kind: input, shape index: {}]
  %s2 = inlined_call_operand.vmem [shape: bf16[64,128], index: 2, kind: input, shape index: {}]
  %s3 = inlined_call_operand.vmem [shape: bf16[128,128], index: 3, kind: input, shape index: {}]
  %s4 = inlined_call_operand.vmem [shape: f32[1,128], index: 4, kind: input, shape index: {}]
  %s5 = inlined_call_operand.vmem [shape: bf16[128,128], index: 5, kind: input, shape index: {}]
  %s6 = inlined_call_operand.vmem [shape: f32[1,128], index: 6, kind: input, shape index: {}]
  %s7 = inlined_call_operand.vmem [shape: f32[2,1,128], index: 7, kind: output, shape index: {0}]
  %s8 = inlined_call_operand.vmem [shape: f32[16,128], index: 8, kind: output, shape index: {1}]
  %9 = xla_tuple %s7, %s8
  %s10 = sld [smem:[#allocation0]]
  $region69: #{rdrop_forward.1} parent=0
    _
  %s12 = ssub.s32 1, %s10
  %s13 = scalar_select 0, %s12, %s10
  loop: start=0, step=1, limit=4
  $region2: #{rdrop_forward.1} parent=0 // loop_pre_header
    _
  $region3: #{rdrop_forward.1} parent=0 // loop_header
    %s15 = sphi 0, %s19
    %p16 = scmp.ge.s32.totalorder %s15, 4
    %s25 = sphi 0, %s27
    %s28 = sphi 0, %s25
    %s29 = sphi 0, %s28
    %s45 = sphi 0, %s29
    %s51 = sphi 0, %s53
    %s54 = sphi 0, %s51
    %s55 = sphi 0, %s54
    %s71 = sphi 0, %s55
    %s75 = sphi 0, %s75
    %s77 = sphi 0, %s75
    %s78 = sphi 0, %s77
    %s92 = sphi 0, %s78
    %s96 = sphi 0, %s96
    %s98 = sphi 0, %s96
    %s99 = sphi 0, %s98
    %s113 = sphi 0, %s99
    %s117 = sphi 0, %s117
    %s119 = sphi 0, %s117
    %s120 = sphi 0, %s119
    %s134 = sphi 0, %s120
    %s138 = sphi 0, %s138
    %s140 = sphi 0, %s138
    %s141 = sphi 0, %s140
    %s155 = sphi 0, %s141
    %s159 = sphi 0, %s159
    %s161 = sphi 0, %s159
    %s162 = sphi 0, %s161
    %s176 = sphi 0, %s162
    %s182 = sphi 0, %s184
    %s185 = sphi 0, %s182
    %s186 = sphi 0, %s185
    %s202 = sphi 0, %s186
    %s208 = sphi 0, %s210
    %s211 = sphi 0, %s208
    %s212 = sphi 0, %s211
    %s228 = sphi 0, %s212
  $region4: #{rdrop_forward.1} parent=0 // loop_header_branch
    %18 = sbr.rel (%p16) target = $region8
  $region5: #{rdrop_forward.1} parent=0 // loop_body
    %s20 = ssub.s32 %s15, 1
    %s21 = ssub.s32 %s15, 2
    %s22 = sadd.s32 %s15, 1
    %s23 = ssub.s32 %s15, %s22
    %p24 = scmp.eq.s32.totalorder %s23, 0
    %s26 = sadd.s32 %s25, 1
    %s27 = scalar_select %p24, %s25, %s26
    %p30 = pneg %p24
    %p31 = scmp.eq.s32.totalorder %s15, 1
    %p32 = por %p30, %p31
    %p33 = scmp.ne.s32.totalorder %s25, %s28
    %p34 = scmp.eq.s32.totalorder %s15, 0
    %p35 = por %p33, %p34
    %p36 = scmp.ne.s32.totalorder %s25, %s28
    %p37 = scmp.eq.s32.totalorder %s20, 1
    %p38 = por %p36, %p37
    %p39 = scmp.ne.s32.totalorder %s28, %s29
    %p40 = scmp.eq.s32.totalorder %s20, 0
    %p41 = por %p39, %p40
    %p42 = scmp.ne.s32.totalorder %s28, %s29
    %p43 = scmp.eq.s32.totalorder %s21, 1
    %p44 = por %p42, %p43
    %p46 = scmp.ne.s32.totalorder %s29, %s45
    %p47 = scmp.eq.s32.totalorder %s21, 0
    %p48 = por %p46, %p47
    %s49 = ssub.s32 %s15, %s22
    %p50 = scmp.eq.s32.totalorder %s49, 0
    %s52 = sadd.s32 %s51, 1
    %s53 = scalar_select %p50, %s51, %s52
    %p56 = pneg %p50
    %p57 = scmp.eq.s32.totalorder %s15, 1
    %p58 = por %p56, %p57
    %p59 = scmp.ne.s32.totalorder %s51, %s54
    %p60 = scmp.eq.s32.totalorder %s15, 0
    %p61 = por %p59, %p60
    %p62 = scmp.ne.s32.totalorder %s51, %s54
    %p63 = scmp.eq.s32.totalorder %s20, 1
    %p64 = por %p62, %p63
    %p65 = scmp.ne.s32.totalorder %s54, %s55
    %p66 = scmp.eq.s32.totalorder %s20, 0
    %p67 = por %p65, %p66
    %p68 = scmp.ne.s32.totalorder %s54, %s55
    %p69 = scmp.eq.s32.totalorder %s21, 1
    %p70 = por %p68, %p69
    %p72 = scmp.ne.s32.totalorder %s55, %s71
    %p73 = scmp.eq.s32.totalorder %s21, 0
    %p74 = por %p72, %p73
    %s76 = sadd.s32 %s75, 1
    %p79 = scmp.eq.s32.totalorder %s15, 1
    %p80 = scmp.ne.s32.totalorder %s75, %s77
    %p81 = scmp.eq.s32.totalorder %s15, 0
    %p82 = por %p80, %p81
    %p83 = scmp.ne.s32.totalorder %s75, %s77
    %p84 = scmp.eq.s32.totalorder %s20, 1
    %p85 = por %p83, %p84
    %p86 = scmp.ne.s32.totalorder %s77, %s78
    %p87 = scmp.eq.s32.totalorder %s20, 0
    %p88 = por %p86, %p87
    %p89 = scmp.ne.s32.totalorder %s77, %s78
    %p90 = scmp.eq.s32.totalorder %s21, 1
    %p91 = por %p89, %p90
    %p93 = scmp.ne.s32.totalorder %s78, %s92
    %p94 = scmp.eq.s32.totalorder %s21, 0
    %p95 = por %p93, %p94
    %s97 = sadd.s32 %s96, 1
    %p100 = scmp.eq.s32.totalorder %s15, 1
    %p101 = scmp.ne.s32.totalorder %s96, %s98
    %p102 = scmp.eq.s32.totalorder %s15, 0
    %p103 = por %p101, %p102
    %p104 = scmp.ne.s32.totalorder %s96, %s98
    %p105 = scmp.eq.s32.totalorder %s20, 1
    %p106 = por %p104, %p105
    %p107 = scmp.ne.s32.totalorder %s98, %s99
    %p108 = scmp.eq.s32.totalorder %s20, 0
    %p109 = por %p107, %p108
    %p110 = scmp.ne.s32.totalorder %s98, %s99
    %p111 = scmp.eq.s32.totalorder %s21, 1
    %p112 = por %p110, %p111
    %p114 = scmp.ne.s32.totalorder %s99, %s113
    %p115 = scmp.eq.s32.totalorder %s21, 0
    %p116 = por %p114, %p115
    %s118 = sadd.s32 %s117, 1
    %p121 = scmp.eq.s32.totalorder %s15, 1
    %p122 = scmp.ne.s32.totalorder %s117, %s119
    %p123 = scmp.eq.s32.totalorder %s15, 0
    %p124 = por %p122, %p123
    %p125 = scmp.ne.s32.totalorder %s117, %s119
    %p126 = scmp.eq.s32.totalorder %s20, 1
    %p127 = por %p125, %p126
    %p128 = scmp.ne.s32.totalorder %s119, %s120
    %p129 = scmp.eq.s32.totalorder %s20, 0
    %p130 = por %p128, %p129
    %p131 = scmp.ne.s32.totalorder %s119, %s120
    %p132 = scmp.eq.s32.totalorder %s21, 1
    %p133 = por %p131, %p132
    %p135 = scmp.ne.s32.totalorder %s120, %s134
    %p136 = scmp.eq.s32.totalorder %s21, 0
    %p137 = por %p135, %p136
    %s139 = sadd.s32 %s138, 1
    %p142 = scmp.eq.s32.totalorder %s15, 1
    %p143 = scmp.ne.s32.totalorder %s138, %s140
    %p144 = scmp.eq.s32.totalorder %s15, 0
    %p145 = por %p143, %p144
    %p146 = scmp.ne.s32.totalorder %s138, %s140
    %p147 = scmp.eq.s32.totalorder %s20, 1
    %p148 = por %p146, %p147
    %p149 = scmp.ne.s32.totalorder %s140, %s141
    %p150 = scmp.eq.s32.totalorder %s20, 0
    %p151 = por %p149, %p150
    %p152 = scmp.ne.s32.totalorder %s140, %s141
    %p153 = scmp.eq.s32.totalorder %s21, 1
    %p154 = por %p152, %p153
    %p156 = scmp.ne.s32.totalorder %s141, %s155
    %p157 = scmp.eq.s32.totalorder %s21, 0
    %p158 = por %p156, %p157
    %s160 = sadd.s32 %s159, 1
    %p163 = scmp.eq.s32.totalorder %s15, 1
    %p164 = scmp.ne.s32.totalorder %s159, %s161
    %p165 = scmp.eq.s32.totalorder %s15, 0
    %p166 = por %p164, %p165
    %p167 = scmp.ne.s32.totalorder %s159, %s161
    %p168 = scmp.eq.s32.totalorder %s20, 1
    %p169 = por %p167, %p168
    %p170 = scmp.ne.s32.totalorder %s161, %s162
    %p171 = scmp.eq.s32.totalorder %s20, 0
    %p172 = por %p170, %p171
    %p173 = scmp.ne.s32.totalorder %s161, %s162
    %p174 = scmp.eq.s32.totalorder %s21, 1
    %p175 = por %p173, %p174
    %p177 = scmp.ne.s32.totalorder %s162, %s176
    %p178 = scmp.eq.s32.totalorder %s21, 0
    %p179 = por %p177, %p178
    %s180 = ssub.s32 %s15, %s22
    %p181 = scmp.eq.s32.totalorder %s180, 0
    %s183 = sadd.s32 %s182, 1
    %s184 = scalar_select %p181, %s182, %s183
    %p187 = pneg %p181
    %p188 = scmp.eq.s32.totalorder %s15, 1
    %p189 = por %p187, %p188
    %p190 = scmp.ne.s32.totalorder %s182, %s185
    %p191 = scmp.eq.s32.totalorder %s15, 0
    %p192 = por %p190, %p191
    %p193 = scmp.ne.s32.totalorder %s182, %s185
    %p194 = scmp.eq.s32.totalorder %s20, 1
    %p195 = por %p193, %p194
    %p196 = scmp.ne.s32.totalorder %s185, %s186
    %p197 = scmp.eq.s32.totalorder %s20, 0
    %p198 = por %p196, %p197
    %p199 = scmp.ne.s32.totalorder %s185, %s186
    %p200 = scmp.eq.s32.totalorder %s21, 1
    %p201 = por %p199, %p200
    %p203 = scmp.ne.s32.totalorder %s186, %s202
    %p204 = scmp.eq.s32.totalorder %s21, 0
    %p205 = por %p203, %p204
    %s206 = ssub.s32 %s15, %s22
    %p207 = scmp.eq.s32.totalorder %s206, 0
    %s209 = sadd.s32 %s208, 1
    %s210 = scalar_select %p207, %s208, %s209
    %p213 = pneg %p207
    %p214 = scmp.eq.s32.totalorder %s15, 1
    %p215 = por %p213, %p214
    %p216 = scmp.ne.s32.totalorder %s208, %s211
    %p217 = scmp.eq.s32.totalorder %s15, 0
    %p218 = por %p216, %p217
    %p219 = scmp.ne.s32.totalorder %s208, %s211
    %p220 = scmp.eq.s32.totalorder %s20, 1
    %p221 = por %p219, %p220
    %p222 = scmp.ne.s32.totalorder %s211, %s212
    %p223 = scmp.eq.s32.totalorder %s20, 0
    %p224 = por %p222, %p223
    %p225 = scmp.ne.s32.totalorder %s211, %s212
    %p226 = scmp.eq.s32.totalorder %s21, 1
    %p227 = por %p225, %p226
    %p229 = scmp.ne.s32.totalorder %s212, %s228
    %p230 = scmp.eq.s32.totalorder %s21, 0
    %p231 = por %p229, %p230
    %p232 = scmp.le.s32.totalorder 1, %s15
    %p233 = scmp.lt.s32.totalorder %s15, 3
    %p234 = pnand %p232, %p233
    %p235 = pneg %p234
    // Predicated region
    $region9: #{rdrop_forward.1} parent=5 // pred_check
      _
    $region10: #{rdrop_forward.1} parent=5 // pred_check_branch
      %237 = sbr.rel (%p234) target = $region12
    $region11: #{rdrop_forward.1} parent=5 // pred_region
      %s238 = ssub.s32 %s15, 1
      // Predicated region
      $region13: #{rdrop_forward.1} parent=11 // pred_check
        %p239 = pneg %p88
      $region14: #{rdrop_forward.1} parent=11 // pred_check_branch
        %241 = sbr.rel (%p239) target = $region16
      $region15: #{rdrop_forward.1} parent=11 // pred_region
        _
      $region16: #{rdrop_forward.1} parent=11 // pred_fallthru
        _
      // Predicated region
      $region17: #{rdrop_forward.1} parent=11 // pred_check
        %p242 = pneg %p109
      $region18: #{rdrop_forward.1} parent=11 // pred_check_branch
        %244 = sbr.rel (%p242) target = $region20
      $region19: #{rdrop_forward.1} parent=11 // pred_region
        _
      $region20: #{rdrop_forward.1} parent=11 // pred_fallthru
        _
      // Predicated region
      $region21: #{rdrop_forward.1} parent=11 // pred_check
        %p245 = pneg %p130
      $region22: #{rdrop_forward.1} parent=11 // pred_check_branch
        %247 = sbr.rel (%p245) target = $region24
      $region23: #{rdrop_forward.1} parent=11 // pred_region
        _
      $region24: #{rdrop_forward.1} parent=11 // pred_fallthru
        _
      // Predicated region
      $region25: #{rdrop_forward.1} parent=11 // pred_check
        %p248 = pneg %p151
      $region26: #{rdrop_forward.1} parent=11 // pred_check_branch
        %250 = sbr.rel (%p248) target = $region28
      $region27: #{rdrop_forward.1} parent=11 // pred_region
        _
      $region28: #{rdrop_forward.1} parent=11 // pred_fallthru
        _
      // Predicated region
      $region29: #{rdrop_forward.1} parent=11 // pred_check
        %p251 = pneg %p172
      $region30: #{rdrop_forward.1} parent=11 // pred_check_branch
        %253 = sbr.rel (%p251) target = $region32
      $region31: #{rdrop_forward.1} parent=11 // pred_region
        _
      $region32: #{rdrop_forward.1} parent=11 // pred_fallthru
        _
    $region12: #{rdrop_forward.1} parent=5 // pred_fallthru
      _
    %p254 = scmp.lt.s32.totalorder %s15, 2
    // Predicated region
    $region33: #{rdrop_forward.1} parent=5 // pred_check
      %p255 = pneg %p254
    $region34: #{rdrop_forward.1} parent=5 // pred_check_branch
      %257 = sbr.rel (%p255) target = $region36
    $region35: #{rdrop_forward.1} parent=5 // pred_region
      // Predicated region
      $region37: #{rdrop_forward.1} parent=35 // pred_check
        %p258 = pneg %p35
      $region38: #{rdrop_forward.1} parent=35 // pred_check_branch
        %260 = sbr.rel (%p258) target = $region40
      $region39: #{rdrop_forward.1} parent=35 // pred_region
        %s261 = smul.u32 16, %s15
        %p262 = scmp.lt.s32.totalorder %s261, 31
        %s263 = scalar_select %p262, %s261, 31
        %s264 = smul.addr %s263, 8
        %s265 = scalar_lea.vmem %s0, %s264
        %s266 = smul.u32 16, %s15
      $region40: #{rdrop_forward.1} parent=35 // pred_fallthru
        _
      // Predicated region
      $region41: #{rdrop_forward.1} parent=35 // pred_check
        %p267 = pneg %p61
      $region42: #{rdrop_forward.1} parent=35 // pred_check_branch
        %269 = sbr.rel (%p267) target = $region44
      $region43: #{rdrop_forward.1} parent=35 // pred_region
        %p270 = scmp.lt.s32.totalorder %s15, 1
        %s271 = scalar_select %p270, %s15, 1
        %s272 = smul.addr %s271, 4
        %s273 = scalar_lea.vmem %s1, %s272
      $region44: #{rdrop_forward.1} parent=35 // pred_fallthru
        _
    $region36: #{rdrop_forward.1} parent=5 // pred_fallthru
      _
    %p274 = scmp.le.s32.totalorder 1, %s15
    %p275 = scmp.lt.s32.totalorder %s15, 3
    %p276 = pnand %p274, %p275
    %p277 = pneg %p276
    // Predicated region
    $region45: #{rdrop_forward.1} parent=5 // pred_check
      _
    $region46: #{rdrop_forward.1} parent=5 // pred_check_branch
      %279 = sbr.rel (%p276) target = $region48
    $region47: #{rdrop_forward.1} parent=5 // pred_region
      %s280 = ssub.s32 %s15, 1
      %s281 = smul.u32 16, %s20
      %p282 = scmp.lt.s32.totalorder %s281, 31
      %s283 = scalar_select %p282, %s281, 31
      %s284 = smul.addr %s283, 8
      %s285 = scalar_lea.vmem %s0, %s284
      %p286 = pneg %p41
      %p287 = pneg %p38
      %p288 = scmp.lt.s32.totalorder %s20, 1
      %s289 = scalar_select %p288, %s20, 1
      %s290 = smul.addr %s289, 4
      %s291 = scalar_lea.vmem %s1, %s290
      %p292 = pneg %p67
      %p293 = pneg %p64
      %p294 = pneg %p88
      %p295 = pneg %p85
      %p296 = pneg %p109
      %p297 = pneg %p106
      %p298 = pneg %p130
      %p299 = pneg %p127
      %p300 = pneg %p151
      %p301 = pneg %p148
      %p302 = pneg %p172
      %p303 = pneg %p169
      %p304 = pneg %p198
      %p305 = pneg %p195
      %p306 = scmp.lt.s32.totalorder %s20, 1
      %s307 = scalar_select %p306, %s20, 1
      %s308 = scalar_lea.vmem %s7, %s307
      %p309 = pneg %p224
      %p310 = pneg %p221
      %p311 = scmp.lt.s32.totalorder %s20, 1
      %s312 = scalar_select %p311, %s20, 1
      %s313 = smul.addr %s312, 8
      %s314 = scalar_lea.vmem %s8, %s313
      %s315 = smul.u32 16, %s20
      %p316 = scmp.lt.s32.totalorder %s315, 31
      %s317 = scalar_select %p316, %s315, 31
      %s318 = smul.addr %s317, 8
      %s319 = scalar_lea.vmem %s0, %s318
      %s320 = smul.u32 16, %s20
      %p321 = scmp.lt.s32.totalorder %s20, 1
      %s322 = scalar_select %p321, %s20, 1
      %s323 = smul.addr %s322, 4
      %s324 = scalar_lea.vmem %s1, %s323
      %p325 = scmp.lt.s32.totalorder %s20, 1
      %s326 = scalar_select %p325, %s20, 1
      %s327 = scalar_lea.vmem %s7, %s326
      %p328 = scmp.lt.s32.totalorder %s20, 1
      %s329 = scalar_select %p328, %s20, 1
      %s330 = smul.addr %s329, 8
      %s331 = scalar_lea.vmem %s8, %s330
      %v333 = vld [vmem:[%s319] sm:$0xff]
      %v334 = vld [vmem:[%s319 + $0x8] sm:$0xff]
      %v335 = vld [vmem:[%s319 + $0x10] sm:$0xff]
      %v336 = vld [vmem:[%s319 + $0x18] sm:$0xff]
      %v337 = vld [vmem:[%s319 + $0x20] sm:$0xff]
      %v338 = vld [vmem:[%s319 + $0x28] sm:$0xff]
      %v339 = vld [vmem:[%s319 + $0x30] sm:$0xff]
      %v340 = vld [vmem:[%s319 + $0x38] sm:$0xff]
      %v341 = vld [vmem:[%s319 + $0x40] sm:$0xff]
      %v342 = vld [vmem:[%s319 + $0x48] sm:$0xff]
      %v343 = vld [vmem:[%s319 + $0x50] sm:$0xff]
      %v344 = vld [vmem:[%s319 + $0x58] sm:$0xff]
      %v345 = vld [vmem:[%s319 + $0x60] sm:$0xff]
      %v346 = vld [vmem:[%s319 + $0x68] sm:$0xff]
      %v347 = vld [vmem:[%s319 + $0x70] sm:$0xff]
      %v348 = vld [vmem:[%s319 + $0x78] sm:$0xff]
      %v349 = vlaneseq
      %v350 = vand.u32 %v349, 127
      %351 = vset.pattern.permute.xlu0 0
      %352 = vperm.xlu0 %351, %v333
      %v353 = vpop.permute.xlu0 %352
      %354 = vset.pattern.permute.xlu0 0
      %355 = vperm.xlu0 %354, %v334
      %v356 = vpop.permute.xlu0 %355
      %357 = vset.pattern.permute.xlu0 0
      %358 = vperm.xlu0 %357, %v335
      %v359 = vpop.permute.xlu0 %358
      %360 = vset.pattern.permute.xlu0 0
      %361 = vperm.xlu0 %360, %v336
      %v362 = vpop.permute.xlu0 %361
      %363 = vset.pattern.permute.xlu0 0
      %364 = vperm.xlu0 %363, %v337
      %v365 = vpop.permute.xlu0 %364
      %366 = vset.pattern.permute.xlu0 0
      %367 = vperm.xlu0 %366, %v338
      %v368 = vpop.permute.xlu0 %367
      %369 = vset.pattern.permute.xlu0 0
      %370 = vperm.xlu0 %369, %v339
      %v371 = vpop.permute.xlu0 %370
      %372 = vset.pattern.permute.xlu0 0
      %373 = vperm.xlu0 %372, %v340
      %v374 = vpop.permute.xlu0 %373
      %375 = vset.pattern.permute.xlu0 0
      %376 = vperm.xlu0 %375, %v341
      %v377 = vpop.permute.xlu0 %376
      %378 = vset.pattern.permute.xlu0 0
      %379 = vperm.xlu0 %378, %v342
      %v380 = vpop.permute.xlu0 %379
      %381 = vset.pattern.permute.xlu0 0
      %382 = vperm.xlu0 %381, %v343
      %v383 = vpop.permute.xlu0 %382
      %384 = vset.pattern.permute.xlu0 0
      %385 = vperm.xlu0 %384, %v344
      %v386 = vpop.permute.xlu0 %385
      %387 = vset.pattern.permute.xlu0 0
      %388 = vperm.xlu0 %387, %v345
      %v389 = vpop.permute.xlu0 %388
      %390 = vset.pattern.permute.xlu0 0
      %391 = vperm.xlu0 %390, %v346
      %v392 = vpop.permute.xlu0 %391
      %393 = vset.pattern.permute.xlu0 0
      %394 = vperm.xlu0 %393, %v347
      %v395 = vpop.permute.xlu0 %394
      %396 = vset.pattern.permute.xlu0 0
      %397 = vperm.xlu0 %396, %v348
      %v398 = vpop.permute.xlu0 %397
      %vm399 = vcmp.eq.s32.totalorder %v350, %v353
      %vm400 = vcmp.eq.s32.totalorder %v350, %v356
      %vm401 = vcmp.eq.s32.totalorder %v350, %v359
      %vm402 = vcmp.eq.s32.totalorder %v350, %v362
      %vm403 = vcmp.eq.s32.totalorder %v350, %v365
      %vm404 = vcmp.eq.s32.totalorder %v350, %v368
      %vm405 = vcmp.eq.s32.totalorder %v350, %v371
      %vm406 = vcmp.eq.s32.totalorder %v350, %v374
      %vm407 = vcmp.eq.s32.totalorder %v350, %v377
      %vm408 = vcmp.eq.s32.totalorder %v350, %v380
      %vm409 = vcmp.eq.s32.totalorder %v350, %v383
      %vm410 = vcmp.eq.s32.totalorder %v350, %v386
      %vm411 = vcmp.eq.s32.totalorder %v350, %v389
      %vm412 = vcmp.eq.s32.totalorder %v350, %v392
      %vm413 = vcmp.eq.s32.totalorder %v350, %v395
      %vm414 = vcmp.eq.s32.totalorder %v350, %v398
      %v415 = vsel %vm399, 1, 0
      %v416 = vsel %vm400, 1, 0
      %v417 = vsel %vm401, 1, 0
      %v418 = vsel %vm402, 1, 0
      %v419 = vsel %vm403, 1, 0
      %v420 = vsel %vm404, 1, 0
      %v421 = vsel %vm405, 1, 0
      %v422 = vsel %vm406, 1, 0
      %v423 = vsel %vm407, 1, 0
      %v424 = vsel %vm408, 1, 0
      %v425 = vsel %vm409, 1, 0
      %v426 = vsel %vm410, 1, 0
      %v427 = vsel %vm411, 1, 0
      %v428 = vsel %vm412, 1, 0
      %v429 = vsel %vm413, 1, 0
      %v430 = vsel %vm414, 1, 0
      %v431 = vcvt.s32.f32 %v415
      %v432 = vcvt.s32.f32 %v416
      %v433 = vcvt.s32.f32 %v417
      %v434 = vcvt.s32.f32 %v418
      %v435 = vcvt.s32.f32 %v419
      %v436 = vcvt.s32.f32 %v420
      %v437 = vcvt.s32.f32 %v421
      %v438 = vcvt.s32.f32 %v422
      %v439 = vcvt.s32.f32 %v423
      %v440 = vcvt.s32.f32 %v424
      %v441 = vcvt.s32.f32 %v425
      %v442 = vcvt.s32.f32 %v426
      %v443 = vcvt.s32.f32 %v427
      %v444 = vcvt.s32.f32 %v428
      %v445 = vcvt.s32.f32 %v429
      %v446 = vcvt.s32.f32 %v430
      %v447 = vpack.c.bf16 %v432, %v431
      %v448 = vpack.c.bf16 %v434, %v433
      %v449 = vpack.c.bf16 %v436, %v435
      %v450 = vpack.c.bf16 %v438, %v437
      %v451 = vpack.c.bf16 %v440, %v439
      %v452 = vpack.c.bf16 %v442, %v441
      %v453 = vpack.c.bf16 %v444, %v443
      %v454 = vpack.c.bf16 %v446, %v445
      %v455 = vld [vmem:[%s2] sm:$0xf]
      %v456 = vld [vmem:[%s2 + $0x4] sm:$0xf]
      %v457 = vld [vmem:[%s2 + $0x8] sm:$0xf]
      %v458 = vld [vmem:[%s2 + $0xc] sm:$0xf]
      %v459 = vld [vmem:[%s2 + $0x10] sm:$0xf]
      %v460 = vld [vmem:[%s2 + $0x14] sm:$0xf]
      %v461 = vld [vmem:[%s2 + $0x18] sm:$0xf]
      %v462 = vld [vmem:[%s2 + $0x1c] sm:$0xf]
      %v471 = vunpack.c.l.b16 %v455
      %v472 = vunpack.c.l.b16 %v456
      %v473 = vunpack.c.l.b16 %v457
      %v474 = vunpack.c.l.b16 %v458
      %v475 = vunpack.c.l.b16 %v459
      %v476 = vunpack.c.l.b16 %v460
      %v477 = vunpack.c.l.b16 %v461
      %v478 = vunpack.c.l.b16 %v462
      %v479 = vpack.c.b16 %v472, %v471
      %v480 = vpack.c.b16 %v474, %v473
      %v481 = vpack.c.b16 %v476, %v475
      %v482 = vpack.c.b16 %v478, %v477
      %vm487 = vcmask 523264
      %v489 = vsel %vm487, %v447, 0
      %v492 = vsel %vm487, %v448, 0
      %v495 = vsel %vm487, %v449, 0
      %v498 = vsel %vm487, %v450, 0
      %v501 = vsel %vm487, %v451, 0
      %v504 = vsel %vm487, %v452, 0
      %v507 = vsel %vm487, %v453, 0
      %v510 = vsel %vm487, %v454, 0
      %512 = vmatprep.subr.bf16.mxu0 0
      %513 = vmatpush1.bf16.msra.mxu0 %v479
      %514 = vmatprep.subr.bf16.mxu0 0
      %515 = vmatpush1.bf16.msra.mxu0 %v480
      %516 = vmatprep.subr.bf16.mxu0 0
      %517 = vmatpush1.bf16.msra.mxu0 %v481
      %518 = vmatprep.subr.bf16.mxu0 0
      %519 = vmatpush1.bf16.msra.mxu0 %v482
      %520 = vmatprep.subr.bf16.mxu0 0
      %521 = vmatpush1.bf16.msra.mxu0 0
      %522 = vmatprep.subr.bf16.mxu0 0
      %523 = vmatpush1.bf16.msra.mxu0 0
      %524 = vmatprep.subr.bf16.mxu0 0
      %525 = vmatpush1.bf16.msra.mxu0 0
      %526 = vmatprep.subr.bf16.mxu0 0
      %527 = vmatpush1.bf16.msra.mxu0 0
      %528 = vmatprep.subr.bf16.mxu0 0
      %529 = vmatpush1.bf16.msra.mxu0 0
      %530 = vmatprep.subr.bf16.mxu0 0
      %531 = vmatpush1.bf16.msra.mxu0 0
      %532 = vmatprep.subr.bf16.mxu0 0
      %533 = vmatpush1.bf16.msra.mxu0 0
      %534 = vmatprep.subr.bf16.mxu0 0
      %535 = vmatpush1.bf16.msra.mxu0 0
      %536 = vmatprep.subr.bf16.mxu0 0
      %537 = vmatpush1.bf16.msra.mxu0 0
      %538 = vmatprep.subr.bf16.mxu0 0
      %539 = vmatpush1.bf16.msra.mxu0 0
      %540 = vmatprep.subr.bf16.mxu0 0
      %541 = vmatpush1.bf16.msra.mxu0 0
      %542 = vmatprep.subr.bf16.mxu0 0
      %543 = vmatpush1.bf16.msra.mxu0 0
      %544 = vmatprep.mubr.bf16.mxu0 0
      %545 = vmatmul.mubr.bf16.gmra.mrb[0].mxu0 %v489
      %v546 = vpop.f32.mrb[0].mxu0
      %v547 = vadd.f32 0.0, %v546
      %v548 = vpop.f32.mrb[0].mxu0
      %v549 = vpop.f32.mrb[0].mxu0
      %v550 = vadd.f32 0.0, %v549
      %v551 = vpop.f32.mrb[0].mxu0
      %552 = vmatprep.mubr.bf16.mxu0 0
      %553 = vmatmul.mubr.bf16.gmra.mrb[0].mxu0 %v492
      %v554 = vpop.f32.mrb[0].mxu0
      %v555 = vadd.f32 0.0, %v554
      %v556 = vpop.f32.mrb[0].mxu0
      %v557 = vpop.f32.mrb[0].mxu0
      %v558 = vadd.f32 0.0, %v557
      %v559 = vpop.f32.mrb[0].mxu0
      %560 = vmatprep.mubr.bf16.mxu0 0
      %561 = vmatmul.mubr.bf16.gmra.mrb[0].mxu0 %v495
      %v562 = vpop.f32.mrb[0].mxu0
      %v563 = vadd.f32 0.0, %v562
      %v564 = vpop.f32.mrb[0].mxu0
      %v565 = vpop.f32.mrb[0].mxu0
      %v566 = vadd.f32 0.0, %v565
      %v567 = vpop.f32.mrb[0].mxu0
      %568 = vmatprep.mubr.bf16.mxu0 0
      %569 = vmatmul.mubr.bf16.gmra.mrb[0].mxu0 %v498
      %v570 = vpop.f32.mrb[0].mxu0
      %v571 = vadd.f32 0.0, %v570
      %v572 = vpop.f32.mrb[0].mxu0
      %v573 = vpop.f32.mrb[0].mxu0
      %v574 = vadd.f32 0.0, %v573
      %v575 = vpop.f32.mrb[0].mxu0
      %576 = vmatprep.mubr.bf16.mxu0 0
      %577 = vmatmul.mubr.bf16.gmra.mrb[0].mxu0 %v501
      %v578 = vpop.f32.mrb[0].mxu0
      %v579 = vadd.f32 0.0, %v578
      %v580 = vpop.f32.mrb[0].mxu0
      %v581 = vpop.f32.mrb[0].mxu0
      %v582 = vadd.f32 0.0, %v581
      %v583 = vpop.f32.mrb[0].mxu0
      %584 = vmatprep.mubr.bf16.mxu0 0
      %585 = vmatmul.mubr.bf16.gmra.mrb[0].mxu0 %v504
      %v586 = vpop.f32.mrb[0].mxu0
      %v587 = vadd.f32 0.0, %v586
      %v588 = vpop.f32.mrb[0].mxu0
      %v589 = vpop.f32.mrb[0].mxu0
      %v590 = vadd.f32 0.0, %v589
      %v591 = vpop.f32.mrb[0].mxu0
      %592 = vmatprep.mubr.bf16.mxu0 0
      %593 = vmatmul.mubr.bf16.gmra.mrb[0].mxu0 %v507
      %v594 = vpop.f32.mrb[0].mxu0
      %v595 = vadd.f32 0.0, %v594
      %v596 = vpop.f32.mrb[0].mxu0
      %v597 = vpop.f32.mrb[0].mxu0
      %v598 = vadd.f32 0.0, %v597
      %v599 = vpop.f32.mrb[0].mxu0
      %600 = vmatprep.mubr.bf16.mxu0 0
      %601 = vmatmul.mubr.bf16.gmra.mrb[0].mxu0 %v510
      %v602 = vpop.f32.mrb[0].mxu0
      %v603 = vadd.f32 0.0, %v602
      %v604 = vpop.f32.mrb[0].mxu0
      %v605 = vpop.f32.mrb[0].mxu0
      %v606 = vadd.f32 0.0, %v605
      %v607 = vpop.f32.mrb[0].mxu0
      %608 = vdwg.mxu0
      %v609 = vpack.c.bf16 %v550, %v547
      %v610 = vpack.c.bf16 %v558, %v555
      %v611 = vpack.c.bf16 %v566, %v563
      %v612 = vpack.c.bf16 %v574, %v571
      %v613 = vpack.c.bf16 %v582, %v579
      %v614 = vpack.c.bf16 %v590, %v587
      %v615 = vpack.c.bf16 %v598, %v595
      %v616 = vpack.c.bf16 %v606, %v603
      %v617 = vld [vmem:[%s3] sm:$0xf]
      %v618 = vld [vmem:[%s3 + $0x4] sm:$0xf]
      %v619 = vld [vmem:[%s3 + $0x8] sm:$0xf]
      %v620 = vld [vmem:[%s3 + $0xc] sm:$0xf]
      %v621 = vld [vmem:[%s3 + $0x10] sm:$0xf]
      %v622 = vld [vmem:[%s3 + $0x14] sm:$0xf]
      %v623 = vld [vmem:[%s3 + $0x18] sm:$0xf]
      %v624 = vld [vmem:[%s3 + $0x1c] sm:$0xf]
      %v625 = vld [vmem:[%s3 + $0x20] sm:$0xf]
      %v626 = vld [vmem:[%s3 + $0x24] sm:$0xf]
      %v627 = vld [vmem:[%s3 + $0x28] sm:$0xf]
      %v628 = vld [vmem:[%s3 + $0x2c] sm:$0xf]
      %v629 = vld [vmem:[%s3 + $0x30] sm:$0xf]
      %v630 = vld [vmem:[%s3 + $0x34] sm:$0xf]
      %v631 = vld [vmem:[%s3 + $0x38] sm:$0xf]
      %v632 = vld [vmem:[%s3 + $0x3c] sm:$0xf]
      %v633 = vld [vmem:[%s4] sm:$0x1]
      %v635 = vlaneseq
      %v636 = vshrl.u32 %v635, 7
      %v637 = vsub.s32 0, %v636
      %v638 = vrot.slane %v633, %v637
      %v656 = vunpack.c.l.b16 %v617
      %v657 = vunpack.c.l.b16 %v618
      %v658 = vunpack.c.l.b16 %v619
      %v659 = vunpack.c.l.b16 %v620
      %v660 = vunpack.c.l.b16 %v621
      %v661 = vunpack.c.l.b16 %v622
      %v662 = vunpack.c.l.b16 %v623
      %v663 = vunpack.c.l.b16 %v624
      %v664 = vunpack.c.l.b16 %v625
      %v665 = vunpack.c.l.b16 %v626
      %v666 = vunpack.c.l.b16 %v627
      %v667 = vunpack.c.l.b16 %v628
      %v668 = vunpack.c.l.b16 %v629
      %v669 = vunpack.c.l.b16 %v630
      %v670 = vunpack.c.l.b16 %v631
      %v671 = vunpack.c.l.b16 %v632
      %v672 = vpack.c.b16 %v657, %v656
      %v673 = vpack.c.b16 %v659, %v658
      %v674 = vpack.c.b16 %v661, %v660
      %v675 = vpack.c.b16 %v663, %v662
      %v676 = vpack.c.b16 %v665, %v664
      %v677 = vpack.c.b16 %v667, %v666
      %v678 = vpack.c.b16 %v669, %v668
      %v679 = vpack.c.b16 %v671, %v670
      %688 = vmatprep.subr.bf16.mxu0 0
      %689 = vmatpush1.bf16.msra.mxu0 %v672
      %690 = vmatprep.subr.bf16.mxu0 0
      %691 = vmatpush1.bf16.msra.mxu0 %v673
      %692 = vmatprep.subr.bf16.mxu0 0
      %693 = vmatpush1.bf16.msra.mxu0 %v674
      %694 = vmatprep.subr.bf16.mxu0 0
      %695 = vmatpush1.bf16.msra.mxu0 %v675
      %696 = vmatprep.subr.bf16.mxu0 0
      %697 = vmatpush1.bf16.msra.mxu0 %v676
      %698 = vmatprep.subr.bf16.mxu0 0
      %699 = vmatpush1.bf16.msra.mxu0 %v677
      %700 = vmatprep.subr.bf16.mxu0 0
      %701 = vmatpush1.bf16.msra.mxu0 %v678
      %702 = vmatprep.subr.bf16.mxu0 0
      %703 = vmatpush1.bf16.msra.mxu0 %v679
      %704 = vmatprep.subr.bf16.mxu0 0
      %705 = vmatpush1.bf16.msra.mxu0 0
      %706 = vmatprep.subr.bf16.mxu0 0
      %707 = vmatpush1.bf16.msra.mxu0 0
      %708 = vmatprep.subr.bf16.mxu0 0
      %709 = vmatpush1.bf16.msra.mxu0 0
      %710 = vmatprep.subr.bf16.mxu0 0
      %711 = vmatpush1.bf16.msra.mxu0 0
      %712 = vmatprep.subr.bf16.mxu0 0
      %713 = vmatpush1.bf16.msra.mxu0 0
      %714 = vmatprep.subr.bf16.mxu0 0
      %715 = vmatpush1.bf16.msra.mxu0 0
      %716 = vmatprep.subr.bf16.mxu0 0
      %717 = vmatpush1.bf16.msra.mxu0 0
      %718 = vmatprep.subr.bf16.mxu0 0
      %719 = vmatpush1.bf16.msra.mxu0 0
      %720 = vmatprep.mubr.bf16.mxu0 0
      %721 = vmatmul.mubr.bf16.gmra.mrb[0].mxu0 %v609
      %v722 = vpop.f32.mrb[0].mxu0
      %v723 = vadd.f32 %v638, %v722
      %v724 = vpop.f32.mrb[0].mxu0
      %v725 = vpop.f32.mrb[0].mxu0
      %v726 = vadd.f32 %v638, %v725
      %v727 = vpop.f32.mrb[0].mxu0
      %728 = vmatprep.mubr.bf16.mxu0 0
      %729 = vmatmul.mubr.bf16.gmra.mrb[0].mxu0 %v610
      %v730 = vpop.f32.mrb[0].mxu0
      %v731 = vadd.f32 %v638, %v730
      %v732 = vpop.f32.mrb[0].mxu0
      %v733 = vpop.f32.mrb[0].mxu0
      %v734 = vadd.f32 %v638, %v733
      %v735 = vpop.f32.mrb[0].mxu0
      %736 = vmatprep.mubr.bf16.mxu0 0
      %737 = vmatmul.mubr.bf16.gmra.mrb[0].mxu0 %v611
      %v738 = vpop.f32.mrb[0].mxu0
      %v739 = vadd.f32 %v638, %v738
      %v740 = vpop.f32.mrb[0].mxu0
      %v741 = vpop.f32.mrb[0].mxu0
      %v742 = vadd.f32 %v638, %v741
      %v743 = vpop.f32.mrb[0].mxu0
      %744 = vmatprep.mubr.bf16.mxu0 0
      %745 = vmatmul.mubr.bf16.gmra.mrb[0].mxu0 %v612
      %v746 = vpop.f32.mrb[0].mxu0
      %v747 = vadd.f32 %v638, %v746
      %v748 = vpop.f32.mrb[0].mxu0
      %v749 = vpop.f32.mrb[0].mxu0
      %v750 = vadd.f32 %v638, %v749
      %v751 = vpop.f32.mrb[0].mxu0
      %752 = vmatprep.mubr.bf16.mxu0 0
      %753 = vmatmul.mubr.bf16.gmra.mrb[0].mxu0 %v613
      %v754 = vpop.f32.mrb[0].mxu0
      %v755 = vadd.f32 %v638, %v754
      %v756 = vpop.f32.mrb[0].mxu0
      %v757 = vpop.f32.mrb[0].mxu0
      %v758 = vadd.f32 %v638, %v757
      %v759 = vpop.f32.mrb[0].mxu0
      %760 = vmatprep.mubr.bf16.mxu0 0
      %761 = vmatmul.mubr.bf16.gmra.mrb[0].mxu0 %v614
      %v762 = vpop.f32.mrb[0].mxu0
      %v763 = vadd.f32 %v638, %v762
      %v764 = vpop.f32.mrb[0].mxu0
      %v765 = vpop.f32.mrb[0].mxu0
      %v766 = vadd.f32 %v638, %v765
      %v767 = vpop.f32.mrb[0].mxu0
      %768 = vmatprep.mubr.bf16.mxu0 0
      %769 = vmatmul.mubr.bf16.gmra.mrb[0].mxu0 %v615
      %v770 = vpop.f32.mrb[0].mxu0
      %v771 = vadd.f32 %v638, %v770
      %v772 = vpop.f32.mrb[0].mxu0
      %v773 = vpop.f32.mrb[0].mxu0
      %v774 = vadd.f32 %v638, %v773
      %v775 = vpop.f32.mrb[0].mxu0
      %776 = vmatprep.mubr.bf16.mxu0 0
      %777 = vmatmul.mubr.bf16.gmra.mrb[0].mxu0 %v616
      %v778 = vpop.f32.mrb[0].mxu0
      %v779 = vadd.f32 %v638, %v778
      %v780 = vpop.f32.mrb[0].mxu0
      %v781 = vpop.f32.mrb[0].mxu0
      %v782 = vadd.f32 %v638, %v781
      %v783 = vpop.f32.mrb[0].mxu0
      %784 = vdwg.mxu0
      %v785 = vmul.f32 %v723, %v723
      %v786 = vmul.f32 %v726, %v726
      %v787 = vmul.f32 %v731, %v731
      %v788 = vmul.f32 %v734, %v734
      %v789 = vmul.f32 %v739, %v739
      %v790 = vmul.f32 %v742, %v742
      %v791 = vmul.f32 %v747, %v747
      %v792 = vmul.f32 %v750, %v750
      %v793 = vmul.f32 %v755, %v755
      %v794 = vmul.f32 %v758, %v758
      %v795 = vmul.f32 %v763, %v763
      %v796 = vmul.f32 %v766, %v766
      %v797 = vmul.f32 %v771, %v771
      %v798 = vmul.f32 %v774, %v774
      %v799 = vmul.f32 %v779, %v779
      %v800 = vmul.f32 %v782, %v782
      %v801 = vmul.f32 %v723, %v785
      %v802 = vmul.f32 %v726, %v786
      %v803 = vmul.f32 %v731, %v787
      %v804 = vmul.f32 %v734, %v788
      %v805 = vmul.f32 %v739, %v789
      %v806 = vmul.f32 %v742, %v790
      %v807 = vmul.f32 %v747, %v791
      %v808 = vmul.f32 %v750, %v792
      %v809 = vmul.f32 %v755, %v793
      %v810 = vmul.f32 %v758, %v794
      %v811 = vmul.f32 %v763, %v795
      %v812 = vmul.f32 %v766, %v796
      %v813 = vmul.f32 %v771, %v797
      %v814 = vmul.f32 %v774, %v798
      %v815 = vmul.f32 %v779, %v799
      %v816 = vmul.f32 %v782, %v800
      %v817 = vmul.f32 %v801, 0.044715
      %v818 = vmul.f32 %v802, 0.044715
      %v819 = vmul.f32 %v803, 0.044715
      %v820 = vmul.f32 %v804, 0.044715
      %v821 = vmul.f32 %v805, 0.044715
      %v822 = vmul.f32 %v806, 0.044715
      %v823 = vmul.f32 %v807, 0.044715
      %v824 = vmul.f32 %v808, 0.044715
      %v825 = vmul.f32 %v809, 0.044715
      %v826 = vmul.f32 %v810, 0.044715
      %v827 = vmul.f32 %v811, 0.044715
      %v828 = vmul.f32 %v812, 0.044715
      %v829 = vmul.f32 %v813, 0.044715
      %v830 = vmul.f32 %v814, 0.044715
      %v831 = vmul.f32 %v815, 0.044715
      %v832 = vmul.f32 %v816, 0.044715
      %v833 = vadd.f32 %v723, %v817
      %v834 = vadd.f32 %v726, %v818
      %v835 = vadd.f32 %v731, %v819
      %v836 = vadd.f32 %v734, %v820
      %v837 = vadd.f32 %v739, %v821
      %v838 = vadd.f32 %v742, %v822
      %v839 = vadd.f32 %v747, %v823
      %v840 = vadd.f32 %v750, %v824
      %v841 = vadd.f32 %v755, %v825
      %v842 = vadd.f32 %v758, %v826
      %v843 = vadd.f32 %v763, %v827
      %v844 = vadd.f32 %v766, %v828
      %v845 = vadd.f32 %v771, %v829
      %v846 = vadd.f32 %v774, %v830
      %v847 = vadd.f32 %v779, %v831
      %v848 = vadd.f32 %v782, %v832
      %v849 = vmul.f32 %v833, 0.7978846
      %v850 = vmul.f32 %v834, 0.7978846
      %v851 = vmul.f32 %v835, 0.7978846
      %v852 = vmul.f32 %v836, 0.7978846
      %v853 = vmul.f32 %v837, 0.7978846
      %v854 = vmul.f32 %v838, 0.7978846
      %v855 = vmul.f32 %v839, 0.7978846
      %v856 = vmul.f32 %v840, 0.7978846
      %v857 = vmul.f32 %v841, 0.7978846
      %v858 = vmul.f32 %v842, 0.7978846
      %v859 = vmul.f32 %v843, 0.7978846
      %v860 = vmul.f32 %v844, 0.7978846
      %v861 = vmul.f32 %v845, 0.7978846
      %v862 = vmul.f32 %v846, 0.7978846
      %v863 = vmul.f32 %v847, 0.7978846
      %v864 = vmul.f32 %v848, 0.7978846
      %v865 = vtanh.pop %v849
      %v866 = vtanh.pop %v850
      %v867 = vtanh.pop %v851
      %v868 = vtanh.pop %v852
      %v869 = vtanh.pop %v853
      %v870 = vtanh.pop %v854
      %v871 = vtanh.pop %v855
      %v872 = vtanh.pop %v856
      %v873 = vtanh.pop %v857
      %v874 = vtanh.pop %v858
      %v875 = vtanh.pop %v859
      %v876 = vtanh.pop %v860
      %v877 = vtanh.pop %v861
      %v878 = vtanh.pop %v862
      %v879 = vtanh.pop %v863
      %v880 = vtanh.pop %v864
      %v881 = vadd.f32 %v865, 1.0
      %v882 = vadd.f32 %v866, 1.0
      %v883 = vadd.f32 %v867, 1.0
      %v884 = vadd.f32 %v868, 1.0
      %v885 = vadd.f32 %v869, 1.0
      %v886 = vadd.f32 %v870, 1.0
      %v887 = vadd.f32 %v871, 1.0
      %v888 = vadd.f32 %v872, 1.0
      %v889 = vadd.f32 %v873, 1.0
      %v890 = vadd.f32 %v874, 1.0
      %v891 = vadd.f32 %v875, 1.0
      %v892 = vadd.f32 %v876, 1.0
      %v893 = vadd.f32 %v877, 1.0
      %v894 = vadd.f32 %v878, 1.0
      %v895 = vadd.f32 %v879, 1.0
      %v896 = vadd.f32 %v880, 1.0
      %v897 = vmul.f32 %v881, 0.5
      %v898 = vmul.f32 %v882, 0.5
      %v899 = vmul.f32 %v883, 0.5
      %v900 = vmul.f32 %v884, 0.5
      %v901 = vmul.f32 %v885, 0.5
      %v902 = vmul.f32 %v886, 0.5
      %v903 = vmul.f32 %v887, 0.5
      %v904 = vmul.f32 %v888, 0.5
      %v905 = vmul.f32 %v889, 0.5
      %v906 = vmul.f32 %v890, 0.5
      %v907 = vmul.f32 %v891, 0.5
      %v908 = vmul.f32 %v892, 0.5
      %v909 = vmul.f32 %v893, 0.5
      %v910 = vmul.f32 %v894, 0.5
      %v911 = vmul.f32 %v895, 0.5
      %v912 = vmul.f32 %v896, 0.5
      %v913 = vmul.f32 %v723, %v897
      %v914 = vmul.f32 %v726, %v898
      %v915 = vmul.f32 %v731, %v899
      %v916 = vmul.f32 %v734, %v900
      %v917 = vmul.f32 %v739, %v901
      %v918 = vmul.f32 %v742, %v902
      %v919 = vmul.f32 %v747, %v903
      %v920 = vmul.f32 %v750, %v904
      %v921 = vmul.f32 %v755, %v905
      %v922 = vmul.f32 %v758, %v906
      %v923 = vmul.f32 %v763, %v907
      %v924 = vmul.f32 %v766, %v908
      %v925 = vmul.f32 %v771, %v909
      %v926 = vmul.f32 %v774, %v910
      %v927 = vmul.f32 %v779, %v911
      %v928 = vmul.f32 %v782, %v912
      %v929 = vld [vmem:[%s324] sm:$0xf]
      %v930 = vpack.c.bf16 %v914, %v913
      %v931 = vpack.c.bf16 %v916, %v915
      %v932 = vpack.c.bf16 %v918, %v917
      %v933 = vpack.c.bf16 %v920, %v919
      %v934 = vpack.c.bf16 %v922, %v921
      %v935 = vpack.c.bf16 %v924, %v923
      %v936 = vpack.c.bf16 %v926, %v925
      %v937 = vpack.c.bf16 %v928, %v927
      %938 = vmatprep.subr.bf16.mxu0 0
      %939 = vmatpush1.bf16.msra.mxu0 %v930
      %940 = vmatprep.subr.bf16.mxu0 0
      %941 = vmatpush1.bf16.msra.mxu0 %v931
      %942 = vmatprep.subr.bf16.mxu0 0
      %943 = vmatpush1.bf16.msra.mxu0 %v932
      %944 = vmatprep.subr.bf16.mxu0 0
      %945 = vmatpush1.bf16.msra.mxu0 %v933
      %946 = vmatprep.subr.bf16.mxu0 0
      %947 = vmatpush1.bf16.msra.mxu0 %v934
      %948 = vmatprep.subr.bf16.mxu0 0
      %949 = vmatpush1.bf16.msra.mxu0 %v935
      %950 = vmatprep.subr.bf16.mxu0 0
      %951 = vmatpush1.bf16.msra.mxu0 %v936
      %952 = vmatprep.subr.bf16.mxu0 0
      %953 = vmatpush1.bf16.msra.mxu0 %v937
      %954 = vmatprep.subr.bf16.mxu0 0
      %955 = vmatpush1.bf16.msra.mxu0 0
      %956 = vmatprep.subr.bf16.mxu0 0
      %957 = vmatpush1.bf16.msra.mxu0 0
      %958 = vmatprep.subr.bf16.mxu0 0
      %959 = vmatpush1.bf16.msra.mxu0 0
      %960 = vmatprep.subr.bf16.mxu0 0
      %961 = vmatpush1.bf16.msra.mxu0 0
      %962 = vmatprep.subr.bf16.mxu0 0
      %963 = vmatpush1.bf16.msra.mxu0 0
      %964 = vmatprep.subr.bf16.mxu0 0
      %965 = vmatpush1.bf16.msra.mxu0 0
      %966 = vmatprep.subr.bf16.mxu0 0
      %967 = vmatpush1.bf16.msra.mxu0 0
      %968 = vmatprep.subr.bf16.mxu0 0
      %969 = vmatpush1.bf16.msra.mxu0 0
      %970 = vmatprep.mubr.bf16.mxu0 0
      %971 = vmatmul.mubr.bf16.gmra.mrb[0].mxu0 %v929
      %v972 = vpop.f32.mrb[0].mxu0
      %v973 = vadd.f32 0.0, %v972
      %v974 = vpop.f32.mrb[0].mxu0
      %v975 = vpop.f32.mrb[0].mxu0
      %v976 = vpop.f32.mrb[0].mxu0
      %977 = vdwg.mxu0
      %v978 = vpack.c.bf16 %v973, %v973
      %v979 = vld [vmem:[%s5] sm:$0xf]
      %v980 = vld [vmem:[%s5 + $0x4] sm:$0xf]
      %v981 = vld [vmem:[%s5 + $0x8] sm:$0xf]
      %v982 = vld [vmem:[%s5 + $0xc] sm:$0xf]
      %v983 = vld [vmem:[%s5 + $0x10] sm:$0xf]
      %v984 = vld [vmem:[%s5 + $0x14] sm:$0xf]
      %v985 = vld [vmem:[%s5 + $0x18] sm:$0xf]
      %v986 = vld [vmem:[%s5 + $0x1c] sm:$0xf]
      %v987 = vld [vmem:[%s5 + $0x20] sm:$0xf]
      %v988 = vld [vmem:[%s5 + $0x24] sm:$0xf]
      %v989 = vld [vmem:[%s5 + $0x28] sm:$0xf]
      %v990 = vld [vmem:[%s5 + $0x2c] sm:$0xf]
      %v991 = vld [vmem:[%s5 + $0x30] sm:$0xf]
      %v992 = vld [vmem:[%s5 + $0x34] sm:$0xf]
      %v993 = vld [vmem:[%s5 + $0x38] sm:$0xf]
      %v994 = vld [vmem:[%s5 + $0x3c] sm:$0xf]
      %v995 = vld [vmem:[%s6] sm:$0x1]
      %v997 = vlaneseq
      %v998 = vshrl.u32 %v997, 7
      %v999 = vsub.s32 0, %v998
      %v1000 = vrot.slane %v995, %v999
      %v1018 = vunpack.c.l.b16 %v979
      %v1019 = vunpack.c.l.b16 %v980
      %v1020 = vunpack.c.l.b16 %v981
      %v1021 = vunpack.c.l.b16 %v982
      %v1022 = vunpack.c.l.b16 %v983
      %v1023 = vunpack.c.l.b16 %v984
      %v1024 = vunpack.c.l.b16 %v985
      %v1025 = vunpack.c.l.b16 %v986
      %v1026 = vunpack.c.l.b16 %v987
      %v1027 = vunpack.c.l.b16 %v988
      %v1028 = vunpack.c.l.b16 %v989
      %v1029 = vunpack.c.l.b16 %v990
      %v1030 = vunpack.c.l.b16 %v991
      %v1031 = vunpack.c.l.b16 %v992
      %v1032 = vunpack.c.l.b16 %v993
      %v1033 = vunpack.c.l.b16 %v994
      %v1034 = vpack.c.b16 %v1019, %v1018
      %v1035 = vpack.c.b16 %v1021, %v1020
      %v1036 = vpack.c.b16 %v1023, %v1022
      %v1037 = vpack.c.b16 %v1025, %v1024
      %v1038 = vpack.c.b16 %v1027, %v1026
      %v1039 = vpack.c.b16 %v1029, %v1028
      %v1040 = vpack.c.b16 %v1031, %v1030
      %v1041 = vpack.c.b16 %v1033, %v1032
      %1050 = vmatprep.subr.bf16.mxu0 0
      %1051 = vmatpush1.bf16.msra.mxu0 %v1034
      %1052 = vmatprep.subr.bf16.mxu0 0
      %1053 = vmatpush1.bf16.msra.mxu0 %v1035
      %1054 = vmatprep.subr.bf16.mxu0 0
      %1055 = vmatpush1.bf16.msra.mxu0 %v1036
      %1056 = vmatprep.subr.bf16.mxu0 0
      %1057 = vmatpush1.bf16.msra.mxu0 %v1037
      %1058 = vmatprep.subr.bf16.mxu0 0
      %1059 = vmatpush1.bf16.msra.mxu0 %v1038
      %1060 = vmatprep.subr.bf16.mxu0 0
      %1061 = vmatpush1.bf16.msra.mxu0 %v1039
      %1062 = vmatprep.subr.bf16.mxu0 0
      %1063 = vmatpush1.bf16.msra.mxu0 %v1040
      %1064 = vmatprep.subr.bf16.mxu0 0
      %1065 = vmatpush1.bf16.msra.mxu0 %v1041
      %1066 = vmatprep.subr.bf16.mxu0 0
      %1067 = vmatpush1.bf16.msra.mxu0 0
      %1068 = vmatprep.subr.bf16.mxu0 0
      %1069 = vmatpush1.bf16.msra.mxu0 0
      %1070 = vmatprep.subr.bf16.mxu0 0
      %1071 = vmatpush1.bf16.msra.mxu0 0
      %1072 = vmatprep.subr.bf16.mxu0 0
      %1073 = vmatpush1.bf16.msra.mxu0 0
      %1074 = vmatprep.subr.bf16.mxu0 0
      %1075 = vmatpush1.bf16.msra.mxu0 0
      %1076 = vmatprep.subr.bf16.mxu0 0
      %1077 = vmatpush1.bf16.msra.mxu0 0
      %1078 = vmatprep.subr.bf16.mxu0 0
      %1079 = vmatpush1.bf16.msra.mxu0 0
      %1080 = vmatprep.subr.bf16.mxu0 0
      %1081 = vmatpush1.bf16.msra.mxu0 0
      %1082 = vmatprep.mubr.bf16.mxu0 0
      %1083 = vmatmul.mubr.bf16.gmra.mrb[0].mxu0 %v978
      %v1084 = vpop.f32.mrb[0].mxu0
      %v1085 = vadd.f32 %v1000, %v1084
      %v1086 = vpop.f32.mrb[0].mxu0
      %v1087 = vpop.f32.mrb[0].mxu0
      %v1088 = vpop.f32.mrb[0].mxu0
      %1089 = vdwg.mxu0
      %1090 = vst [vmem:[%s331] sm:$0xff] %v1085
      %vm1091 = vcmp.lt.s32.totalorder %v350, 2
      %v1092 = vsel %vm1091, %v1085, -1e+30
      %1093 = vmax.xlane.f32.xlu0 %v1092
      %v1094 = vpop.xlane.xlu0 %1093
      %v1095 = vsub.f32 %v1092, %v1094
      %v1096 = vmul.f32 %v1095, 1.442695
      %v1097 = vpow.pop %v1096
      %v1098 = vsel %vm1091, %v1097, 0.0
      %1099 = vadd.xlane.f32.xlu0 %v1098
      %v1100 = vpop.xlane.xlu0 %1099
      %v1101 = vlog2.pop %v1100
      %v1102 = vmul.f32 %v1101, 0.6931472
      %v1103 = vsub.f32 %v1095, %v1102
      %v1104 = vrcp.pop %v1100
      %v1105 = vmul.f32 %v1098, %v1104
      %v1106 = vsub.f32 %v1103, %v1103
      %v1107 = vmul.f32 %v1105, %v1106
      %1108 = vadd.xlane.f32.xlu0 %v1107
      %v1109 = vpop.xlane.xlu0 %1108
      %v1110 = vrot.slane %v1109, 4
      %v1111 = vadd.f32 %v1109, %v1110
      %v1112 = vrot.slane %v1111, 2
      %v1113 = vadd.f32 %v1111, %v1112
      %v1114 = vrot.slane %v1113, 1
      %v1115 = vadd.f32 %v1113, %v1114
      %s1116 = vtos %v1115
      %s1117 = sadd.f32 %s1116, %s1116
      %s1118 = smul.f32 %s1117, 0.5
      %v1119 = vstv %s1118
      %v1120 = vadd.f32 %v1119, 0.0
      %1121 = vst [vmem:[%s327] sm:$0x1] %v1120
      %p1122 = scmp.lt.s32.totalorder %s20, 1
      %s1123 = scalar_select %p1122, %s20, 1
      %s1124 = scalar_lea.vmem %s7, %s1123
      %p1125 = scmp.lt.s32.totalorder %s20, 1
      %s1126 = scalar_select %p1125, %s20, 1
      %s1127 = smul.addr %s1126, 8
      %s1128 = scalar_lea.vmem %s8, %s1127
      // Predicated region
      $region49: #{rdrop_forward.1} parent=47 // pred_check
        %p1129 = pneg %p195
      $region50: #{rdrop_forward.1} parent=47 // pred_check_branch
        %1131 = sbr.rel (%p1129) target = $region52
      $region51: #{rdrop_forward.1} parent=47 // pred_region
        _
      $region52: #{rdrop_forward.1} parent=47 // pred_fallthru
        _
      // Predicated region
      $region53: #{rdrop_forward.1} parent=47 // pred_check
        %p1132 = pneg %p221
      $region54: #{rdrop_forward.1} parent=47 // pred_check_branch
        %1134 = sbr.rel (%p1132) target = $region56
      $region55: #{rdrop_forward.1} parent=47 // pred_region
        _
      $region56: #{rdrop_forward.1} parent=47 // pred_fallthru
        _
    $region48: #{rdrop_forward.1} parent=5 // pred_fallthru
      _
    %p1135 = scmp.le.s32.totalorder 2, %s15
    // Predicated region
    $region57: #{rdrop_forward.1} parent=5 // pred_check
      %p1136 = pneg %p1135
    $region58: #{rdrop_forward.1} parent=5 // pred_check_branch
      %1138 = sbr.rel (%p1136) target = $region60
    $region59: #{rdrop_forward.1} parent=5 // pred_region
      %s1139 = ssub.s32 %s15, 2
      // Predicated region
      $region61: #{rdrop_forward.1} parent=59 // pred_check
        %p1140 = pneg %p201
      $region62: #{rdrop_forward.1} parent=59 // pred_check_branch
        %1142 = sbr.rel (%p1140) target = $region64
      $region63: #{rdrop_forward.1} parent=59 // pred_region
        %p1143 = scmp.lt.s32.totalorder %s21, 1
        %s1144 = scalar_select %p1143, %s21, 1
        %s1145 = scalar_lea.vmem %s7, %s1144
      $region64: #{rdrop_forward.1} parent=59 // pred_fallthru
        _
      // Predicated region
      $region65: #{rdrop_forward.1} parent=59 // pred_check
        %p1146 = pneg %p227
      $region66: #{rdrop_forward.1} parent=59 // pred_check_branch
        %1148 = sbr.rel (%p1146) target = $region68
      $region67: #{rdrop_forward.1} parent=59 // pred_region
        %p1149 = scmp.lt.s32.totalorder %s21, 1
        %s1150 = scalar_select %p1149, %s21, 1
        %s1151 = smul.addr %s1150, 8
        %s1152 = scalar_lea.vmem %s8, %s1151
      $region68: #{rdrop_forward.1} parent=59 // pred_fallthru
        _
    $region60: #{rdrop_forward.1} parent=5 // pred_fallthru
      _
  $region6: #{rdrop_forward.1} parent=0 // loop_footer
    %s19 = sadd.s32 1, %s15
  $region7: #{rdrop_forward.1} parent=0 // loop_footer_branch
    %14 = sbr.rel target = $region3
  $region8: #{rdrop_forward.1} parent=0 // loop_exit
    _

</llo_original>
